<compile_context>
chip_gen: v5e
topology: v5e:2x2
jax: 0.10.0
libtpu: 0.0.40
codegen_flags: <defaults>
</compile_context>

<pallas_src>
import jax
import jax.numpy as jnp
from jax.experimental import pallas as pl
from jax.experimental.pallas import tpu as pltpu


def _round_up(x, m):
    return ((x + m - 1) // m) * m


def _physical_vmem_bytes():
    """Best-effort physical VMEM size; conservative 64 MiB default (v7x-safe)."""
    try:
        info = pltpu.get_tpu_info()
        cap = int(getattr(info, "vmem_capacity_bytes", 0) or 0)
        if cap > 0:
            return cap
    except Exception:
        pass
    try:
        kind = jax.devices()[0].device_kind.lower()
    except Exception:
        kind = ""
    if any(g in kind for g in ("v2", "v3", "v4", "v5", "v6")):
        return 128 << 20
    return 64 << 20  # v7x / unknown: be conservative


def _plan_tiling(c_pad, h_base, budget, csz, single_buffer_weights):
    """Pick (tm, th, h_pad). Prefer th == h_base (weights resident, grid_h==1)."""
    osz = 4  # plan for the worst case (f32 output tiles)

    def fused_bytes(tm, th):
        nbuf_w = 1 if single_buffer_weights else 2
        return (2 * tm * c_pad * csz                # x tiles, double buffered
                + 2 * tm * c_pad * osz              # out tiles, double buffered
                + nbuf_w * 2 * c_pad * th * csz     # W1 + W2 resident
                + tm * th * (csz + 4)               # h intermediate (f32 + cast)
                + 8 * th * 4 + 8 * c_pad * 4)       # biases (sublane padded)

    def stream_bytes(tm, th):
        return (2 * tm * c_pad * csz
                + 2 * tm * c_pad * osz
                + 2 * 2 * c_pad * th * csz          # W1 + W2 blocks, double buffered
                + tm * c_pad * 4                    # f32 accumulator scratch
                + tm * th * (csz + 4)
                + 8 * th * 4 + 8 * c_pad * 4)

    # 1) Preferred: whole hidden dim resident -> weights DMA'd from HBM once.
    #    Shrink tm before giving up residency (residency >> bigger row tiles).
    for tm in (256, 128, 64):
        if fused_bytes(tm, h_base) <= budget:
            return {"tm": tm, "th": h_base, "h_pad": h_base}
    # 2) Stream the hidden dim: big row tile (arithmetic intensity ~ tm FLOP per
    #    weight byte), largest chunk that fits, hidden dim padded to a multiple.
    for tm in (512, 256, 128, 64):
        for th in (4096, 2048, 1024, 512, 256, 128):
            if th > h_base:
                continue
            if stream_bytes(tm, th) <= budget:
                return {"tm": tm, "th": th, "h_pad": _round_up(h_base, th)}
    # 3) Last resort.
    return {"tm": 64, "th": 128, "h_pad": _round_up(h_base, 128)}


def _ffn_kernel_fused(x_ref, w1_ref, b1_ref, w2_ref, b2_ref, o_ref):
    # Single-pass: whole hidden dim resident, no accumulator scratch.
    h = jnp.dot(x_ref[...], w1_ref[...], preferred_element_type=jnp.float32)
    h = jnp.maximum(h + b1_ref[...], 0.0)
    out = jnp.dot(h.astype(w2_ref.dtype), w2_ref[...],
                  preferred_element_type=jnp.float32)
    # TODO(synk): nn.Dropout(config.dp) is an eval-mode no-op here; training-mode
    # dropout needs pltpu.prng_seed + prng_random_bits masking and 1/(1-p) scale.
    o_ref[...] = (out + b2_ref[...]).astype(o_ref.dtype)


def _ffn_kernel_acc(x_ref, w1_ref, b1_ref, w2_ref, b2_ref, o_ref, acc_ref):
    # Hidden dim streamed across grid axis 1; f32 accumulator in VMEM scratch.
    k = pl.program_id(1)

    @pl.when(k == 0)
    def _init():
        acc_ref[...] = jnp.zeros_like(acc_ref)

    h = jnp.dot(x_ref[...], w1_ref[...], preferred_element_type=jnp.float32)
    h = jnp.maximum(h + b1_ref[...], 0.0)
    acc_ref[...] += jnp.dot(h.astype(w2_ref.dtype), w2_ref[...],
                            preferred_element_type=jnp.float32)

    @pl.when(k == pl.num_programs(1) - 1)
    def _finalize():
        # TODO(synk): training-mode dropout would be applied here (see above).
        o_ref[...] = (acc_ref[...] + b2_ref[...]).astype(o_ref.dtype)


def make_feed_forward(w1, b1, w2, b2, *, compute_dtype=jnp.bfloat16,
                      out_dtype=None, single_buffer_weights=True):
    """Build a jitted x:(B,T,C)->(B,T,C) FFN. Weights are cast/padded ONCE here.

    w1: (C, H), b1: (H,), w2: (H, C), b2: (C,)   with H = 4*C typically.
    """
    C, H = w1.shape
    assert w2.shape == (H, C) and b1.shape == (H,) and b2.shape == (C,)

    c_pad = _round_up(C, 128)            # lane-dense output + full-width MXU N/K
    h_base = _round_up(H, 128)
    csz = jnp.dtype(compute_dtype).itemsize

    phys = _physical_vmem_bytes()
    budget = max(min(int(phys * 0.85), phys - (8 << 20)), 32 << 20)

    plan = _plan_tiling(c_pad, h_base, budget, csz, single_buffer_weights)
    tm_plan, th, h_pad = plan["tm"], plan["th"], plan["h_pad"]
    grid_h = h_pad // th

    # ---- one-time (hoisted) weight cast + zero padding; exact no-ops through
    # ReLU and the second matmul, so padded math is bit-identical on real cols.
    w1c = jnp.pad(w1.astype(compute_dtype), ((0, c_pad - C), (0, h_pad - H)))
    b1f = jnp.pad(b1.astype(jnp.float32), ((0, h_pad - H),)).reshape(1, h_pad)
    w2c = jnp.pad(w2.astype(compute_dtype), ((0, h_pad - H), (0, c_pad - C)))
    b2f = jnp.pad(b2.astype(jnp.float32), ((0, c_pad - C),)).reshape(1, c_pad)

    def _wspec(shape, imap, invariant):
        if invariant and single_buffer_weights:
            return pl.BlockSpec(shape, imap, pipeline_mode=pl.Buffered(1))
        return pl.BlockSpec(shape, imap)

    def _run(x, w1c, b1f, w2c, b2f):
        B, T, Cx = x.shape
        assert Cx == C, "embedding dim mismatch"
        M = B * T
        od = out_dtype if out_dtype is not None else x.dtype
        osz = jnp.dtype(od).itemsize

        # --- row tiling: cdiv + zero padding ---
        tm_eff = min(_round_up(tm_plan, 8), _round_up(M, 8))
        m_pad = _round_up(M, tm_eff)
        grid_m = m_pad // tm_eff
        if grid_h == 1 and grid_m == 1 and m_pad > 8:
            # v7x: make sure the "parallel" row axis can feed both TensorCores.
            cand = _round_up((m_pad + 1) // 2, 8)
            m_pad = _round_up(M, cand)
            tm_eff = cand
            grid_m = m_pad // cand

        x2d = x.reshape(M, C).astype(compute_dtype)
        if m_pad != M or c_pad != C:
            x2d = jnp.pad(x2d, ((0, m_pad - M), (0, c_pad - C)))

        # --- explicit VMEM budget, capped at ~85% of physical VMEM ---
        nbuf_w = 1 if (grid_h == 1 and single_buffer_weights) else 2
        est = (2 * tm_eff * c_pad * csz
               + 2 * tm_eff * c_pad * osz
               + nbuf_w * 2 * c_pad * th * csz
               + (tm_eff * c_pad * 4 if grid_h > 1 else 0)
               + tm_eff * th * (csz + 4)
               + 8 * th * 4 + 8 * c_pad * 4)
        vmem_limit = int(min(budget, max(est + est // 2 + (4 << 20), 16 << 20)))

        if grid_h == 1:
            grid = (grid_m,)
            in_specs = [
                pl.BlockSpec((tm_eff, c_pad), lambda i: (i, 0)),           # x
                _wspec((c_pad, h_pad), lambda i: (0, 0), True),            # W1
                _wspec((1, h_pad), lambda i: (0, 0), True),                # b1
                _wspec((h_pad, c_pad), lambda i: (0, 0), True),            # W2
                _wspec((1, c_pad), lambda i: (0, 0), True),                # b2
            ]
            out_specs = pl.BlockSpec((tm_eff, c_pad), lambda i: (i, 0))
            kernel = _ffn_kernel_fused
            scratch = []
            dims = ("parallel",)
        else:
            grid = (grid_m, grid_h)
            in_specs = [
                pl.BlockSpec((tm_eff, c_pad), lambda i, k: (i, 0)),        # x
                pl.BlockSpec((c_pad, th), lambda i, k: (0, k)),            # W1
                pl.BlockSpec((1, th), lambda i, k: (0, k)),                # b1
                pl.BlockSpec((th, c_pad), lambda i, k: (k, 0)),            # W2
                _wspec((1, c_pad), lambda i, k: (0, 0), True),             # b2
            ]
            out_specs = pl.BlockSpec((tm_eff, c_pad), lambda i, k: (i, 0))
            kernel = _ffn_kernel_acc
            scratch = [pltpu.VMEM((tm_eff, c_pad), jnp.float32)]
            dims = ("parallel", "arbitrary")

        out2d = pl.pallas_call(
            kernel,
            out_shape=jax.ShapeDtypeStruct((m_pad, c_pad), od),
            grid_spec=pltpu.PrefetchScalarGridSpec(
                num_scalar_prefetch=0,
                grid=grid,
                in_specs=in_specs,
                out_specs=out_specs,
                scratch_shapes=scratch,
            ),
            compiler_params=pltpu.CompilerParams(
                dimension_semantics=dims,
                vmem_limit_bytes=vmem_limit,
            ),
        )(x2d, w1c, b1f, w2c, b2f)

        if m_pad != M or c_pad != C:
            out2d = out2d[:M, :C]
        return out2d.reshape(B, T, C)

    _jitted = jax.jit(_run)

    def feed_forward(x):
        return _jitted(x, w1c, b1f, w2c, b2f)

    return feed_forward


def init_params(key, n_embd):
    """Deterministic PyTorch-like init: U(-1/sqrt(fan_in), 1/sqrt(fan_in))."""
    n_hidden = 4 * n_embd
    k1, k2, k3, k4 = jax.random.split(key, 4)
    bound1 = 1.0 / jnp.sqrt(n_embd)
    bound2 = 1.0 / jnp.sqrt(n_hidden)
    # Stored as (in_features, out_features), i.e. transpose of nn.Linear.weight.
    w1 = jax.random.uniform(k1, (n_embd, n_hidden), jnp.float32, -bound1, bound1)
    b1 = jax.random.uniform(k2, (n_hidden,), jnp.float32, -bound1, bound1)
    w2 = jax.random.uniform(k3, (n_hidden, n_embd), jnp.float32, -bound2, bound2)
    b2 = jax.random.uniform(k4, (n_embd,), jnp.float32, -bound2, bound2)
    return w1, b1, w2, b2


if __name__ == "__main__":
    key = jax.random.PRNGKey(0)
    B, T, n_embd = 2, 8, 32  # small shapes consistent with (B, T, C) forward

    kx, kp = jax.random.split(key)
    x = jax.random.normal(kx, (B, T, n_embd), dtype=jnp.float32)
    w1, b1, w2, b2 = init_params(kp, n_embd)

    try:
        ffn = make_feed_forward(w1, b1, w2, b2)
        out = jax.block_until_ready(ffn(x))
    except Exception:
        # Safety net: fall back to default (double-buffered) weight specs if the
        # installed jax rejects pipeline_mode=pl.Buffered(1).
        ffn = make_feed_forward(w1, b1, w2, b2, single_buffer_weights=False)
        out = jax.block_until_ready(ffn(x))
    assert out.shape == (B, T, n_embd)

    # Reference check (eval-mode dropout == identity). The kernel uses bf16 MXU
    # inputs with f32 accumulation, so compare against the same-precision ref.
    xb = x.reshape(-1, n_embd).astype(jnp.bfloat16)
    h = jnp.dot(xb, w1.astype(jnp.bfloat16),
                preferred_element_type=jnp.float32) + b1
    h = jnp.maximum(h, 0.0)
    ref = jnp.dot(h.astype(jnp.bfloat16), w2.astype(jnp.bfloat16),
                  preferred_element_type=jnp.float32) + b2
    ref = ref.reshape(B, T, n_embd)
    assert jnp.allclose(out, ref, atol=2e-2, rtol=2e-2), \
        float(jnp.max(jnp.abs(out - ref)))

    # Loose sanity check against the pure-f32 reference (bf16 rounding tolerance).
    ref_f32 = (jnp.maximum(x.reshape(-1, n_embd) @ w1 + b1, 0.0) @ w2 + b2
               ).reshape(B, T, n_embd)
    assert jnp.allclose(out, ref_f32, atol=5e-2, rtol=5e-2), \
        float(jnp.max(jnp.abs(out - ref_f32)))

    print("KERNEL_OK")
</pallas_src>

<mosaic_0001>
module attributes {stable_mosaic.version = 11 : i64} {
  func.func @_ffn_kernel_fused(%arg0: i32, %arg1: memref<8x128xbf16, #tpu.memory_space<vmem>>, %arg2: memref<128x128xbf16, #tpu.memory_space<vmem>>, %arg3: memref<1x128xf32, #tpu.memory_space<vmem>>, %arg4: memref<128x128xbf16, #tpu.memory_space<vmem>>, %arg5: memref<1x128xf32, #tpu.memory_space<vmem>>, %arg6: memref<8x128xf32, #tpu.memory_space<vmem>>) attributes {dimension_semantics = [#tpu.dimension_semantics<parallel>], iteration_bounds = array<i64: 2>, scalar_prefetch = 0 : i64, scratch_operands = 0 : i64, tpu.core_type = #tpu.core_type<tc>, window_params = [{transform_indices = @transform_0, window_bounds = array<i64: 8, 128>}, {pipeline_mode = #tpu.pipeline_mode<synchronous>, transform_indices = @transform_1, window_bounds = array<i64: 128, 128>}, {pipeline_mode = #tpu.pipeline_mode<synchronous>, transform_indices = @transform_2, window_bounds = array<i64: 1, 128>}, {pipeline_mode = #tpu.pipeline_mode<synchronous>, transform_indices = @transform_3, window_bounds = array<i64: 128, 128>}, {pipeline_mode = #tpu.pipeline_mode<synchronous>, transform_indices = @transform_4, window_bounds = array<i64: 1, 128>}, {transform_indices = @transform_5, window_bounds = array<i64: 8, 128>}]} {
    %c0 = arith.constant 0 : index
    %c0_0 = arith.constant 0 : index
    %0 = vector.load %arg1[%c0, %c0_0] : memref<8x128xbf16, #tpu.memory_space<vmem>>, vector<8x128xbf16>
    %c0_1 = arith.constant 0 : index
    %c0_2 = arith.constant 0 : index
    %1 = vector.load %arg2[%c0_1, %c0_2] : memref<128x128xbf16, #tpu.memory_space<vmem>>, vector<128x128xbf16>
    %cst = arith.constant dense<0.000000e+00> : vector<8x128xf32>
    %2 = tpu.matmul %0, %1, %cst {dimension_numbers = #tpu.dot_dimension_numbers<[1], [0], [0], [1], [0, 0, 1, 1], [], []>} : vector<8x128xbf16>, vector<128x128xbf16>, vector<8x128xf32> -> vector<8x128xf32>
    %c0_3 = arith.constant 0 : index
    %c0_4 = arith.constant 0 : index
    %3 = vector.load %arg3[%c0_3, %c0_4] : memref<1x128xf32, #tpu.memory_space<vmem>>, vector<1x128xf32>
    %4 = vector.broadcast %3 : vector<1x128xf32> to vector<8x128xf32>
    %5 = arith.addf %2, %4 : vector<8x128xf32>
    %cst_5 = arith.constant 0.000000e+00 : f32
    %6 = vector.broadcast %cst_5 : f32 to vector<8x128xf32>
    %7 = arith.maximumf %5, %6 : vector<8x128xf32>
    %8 = arith.truncf %7 : vector<8x128xf32> to vector<8x128xbf16>
    %c0_6 = arith.constant 0 : index
    %c0_7 = arith.constant 0 : index
    %9 = vector.load %arg4[%c0_6, %c0_7] : memref<128x128xbf16, #tpu.memory_space<vmem>>, vector<128x128xbf16>
    %cst_8 = arith.constant dense<0.000000e+00> : vector<8x128xf32>
    %10 = tpu.matmul %8, %9, %cst_8 {dimension_numbers = #tpu.dot_dimension_numbers<[1], [0], [0], [1], [0, 0, 1, 1], [], []>} : vector<8x128xbf16>, vector<128x128xbf16>, vector<8x128xf32> -> vector<8x128xf32>
    %c0_9 = arith.constant 0 : index
    %c0_10 = arith.constant 0 : index
    %11 = vector.load %arg5[%c0_9, %c0_10] : memref<1x128xf32, #tpu.memory_space<vmem>>, vector<1x128xf32>
    %12 = vector.broadcast %11 : vector<1x128xf32> to vector<8x128xf32>
    %13 = arith.addf %10, %12 : vector<8x128xf32>
    %c0_11 = arith.constant 0 : index
    %c0_12 = arith.constant 0 : index
    %14 = vector.load %arg6[%c0_11, %c0_12] : memref<8x128xf32, #tpu.memory_space<vmem>>, vector<8x128xf32>
    tpu.vector_store %arg6[%c0_11, %c0_12], %13 {strides = array<i32>} : memref<8x128xf32, #tpu.memory_space<vmem>>, vector<8x128xf32>,
    return
  }
  func.func @transform_0(%arg0: i32) -> (i32, i32) {
    %c0_i32 = arith.constant 0 : i32
    %c0_i32_0 = arith.constant 0 : i32
    return %arg0, %c0_i32 : i32, i32
  }
  func.func @transform_1(%arg0: i32) -> (i32, i32) {
    %c0_i32 = arith.constant 0 : i32
    %c0_i32_0 = arith.constant 0 : i32
    %c0_i32_1 = arith.constant 0 : i32
    return %c0_i32, %c0_i32_0 : i32, i32
  }
  func.func @transform_2(%arg0: i32) -> (i32, i32) {
    %c0_i32 = arith.constant 0 : i32
    %c0_i32_0 = arith.constant 0 : i32
    %c0_i32_1 = arith.constant 0 : i32
    return %c0_i32, %c0_i32_0 : i32, i32
  }
  func.func @transform_3(%arg0: i32) -> (i32, i32) {
    %c0_i32 = arith.constant 0 : i32
    %c0_i32_0 = arith.constant 0 : i32
    %c0_i32_1 = arith.constant 0 : i32
    return %c0_i32, %c0_i32_0 : i32, i32
  }
  func.func @transform_4(%arg0: i32) -> (i32, i32) {
    %c0_i32 = arith.constant 0 : i32
    %c0_i32_0 = arith.constant 0 : i32
    %c0_i32_1 = arith.constant 0 : i32
    return %c0_i32, %c0_i32_0 : i32, i32
  }
  func.func @transform_5(%arg0: i32) -> (i32, i32) {
    %c0_i32 = arith.constant 0 : i32
    %c0_i32_0 = arith.constant 0 : i32
    return %arg0, %c0_i32 : i32, i32
  }
}

module attributes {stable_mosaic.version = 11 : i64} {
  func.func @_ffn_kernel_fused(%arg0: i32, %arg1: memref<8x128xbf16, #tpu.memory_space<vmem>>, %arg2: memref<128x128xbf16, #tpu.memory_space<vmem>>, %arg3: memref<1x128xf32, #tpu.memory_space<vmem>>, %arg4: memref<128x128xbf16, #tpu.memory_space<vmem>>, %arg5: memref<1x128xf32, #tpu.memory_space<vmem>>, %arg6: memref<8x128xf32, #tpu.memory_space<vmem>>) attributes {dimension_semantics = [#tpu.dimension_semantics<parallel>], iteration_bounds = array<i64: 2>, scalar_prefetch = 0 : i64, scratch_operands = 0 : i64, tpu.core_type = #tpu.core_type<tc>, window_params = [{transform_indices = @transform_0, window_bounds = array<i64: 8, 128>}, {pipeline_mode = #tpu.pipeline_mode<synchronous>, transform_indices = @transform_1, window_bounds = array<i64: 128, 128>}, {pipeline_mode = #tpu.pipeline_mode<synchronous>, transform_indices = @transform_2, window_bounds = array<i64: 1, 128>}, {pipeline_mode = #tpu.pipeline_mode<synchronous>, transform_indices = @transform_3, window_bounds = array<i64: 128, 128>}, {pipeline_mode = #tpu.pipeline_mode<synchronous>, transform_indices = @transform_4, window_bounds = array<i64: 1, 128>}, {transform_indices = @transform_5, window_bounds = array<i64: 8, 128>}]} {
    %c0 = arith.constant 0 : index
    %c0_0 = arith.constant 0 : index
    %0 = vector.load %arg1[%c0, %c0_0] : memref<8x128xbf16, #tpu.memory_space<vmem>>, vector<8x128xbf16>
    %c0_1 = arith.constant 0 : index
    %c0_2 = arith.constant 0 : index
    %1 = vector.load %arg2[%c0_1, %c0_2] : memref<128x128xbf16, #tpu.memory_space<vmem>>, vector<128x128xbf16>
    %cst = arith.constant dense<0.000000e+00> : vector<8x128xf32>
    %2 = tpu.matmul %0, %1, %cst {dimension_numbers = #tpu.dot_dimension_numbers<[1], [0], [0], [1], [0, 0, 1, 1], [], []>} : vector<8x128xbf16>, vector<128x128xbf16>, vector<8x128xf32> -> vector<8x128xf32>
    %c0_3 = arith.constant 0 : index
    %c0_4 = arith.constant 0 : index
    %3 = vector.load %arg3[%c0_3, %c0_4] : memref<1x128xf32, #tpu.memory_space<vmem>>, vector<1x128xf32>
    %4 = vector.broadcast %3 : vector<1x128xf32> to vector<8x128xf32>
    %5 = arith.addf %2, %4 : vector<8x128xf32>
    %cst_5 = arith.constant 0.000000e+00 : f32
    %6 = vector.broadcast %cst_5 : f32 to vector<8x128xf32>
    %7 = arith.maximumf %5, %6 : vector<8x128xf32>
    %8 = arith.truncf %7 : vector<8x128xf32> to vector<8x128xbf16>
    %c0_6 = arith.constant 0 : index
    %c0_7 = arith.constant 0 : index
    %9 = vector.load %arg4[%c0_6, %c0_7] : memref<128x128xbf16, #tpu.memory_space<vmem>>, vector<128x128xbf16>
    %cst_8 = arith.constant dense<0.000000e+00> : vector<8x128xf32>
    %10 = tpu.matmul %8, %9, %cst_8 {dimension_numbers = #tpu.dot_dimension_numbers<[1], [0], [0], [1], [0, 0, 1, 1], [], []>} : vector<8x128xbf16>, vector<128x128xbf16>, vector<8x128xf32> -> vector<8x128xf32>
    %c0_9 = arith.constant 0 : index
    %c0_10 = arith.constant 0 : index
    %11 = vector.load %arg5[%c0_9, %c0_10] : memref<1x128xf32, #tpu.memory_space<vmem>>, vector<1x128xf32>
    %12 = vector.broadcast %11 : vector<1x128xf32> to vector<8x128xf32>
    %13 = arith.addf %10, %12 : vector<8x128xf32>
    %c0_11 = arith.constant 0 : index
    %c0_12 = arith.constant 0 : index
    %14 = vector.load %arg6[%c0_11, %c0_12] : memref<8x128xf32, #tpu.memory_space<vmem>>, vector<8x128xf32>
    tpu.vector_store %arg6[%c0_11, %c0_12], %13 {strides = array<i32>} : memref<8x128xf32, #tpu.memory_space<vmem>>, vector<8x128xf32>,
    return
  }
  func.func @transform_0(%arg0: i32) -> (i32, i32) {
    %c0_i32 = arith.constant 0 : i32
    %c0_i32_0 = arith.constant 0 : i32
    return %arg0, %c0_i32 : i32, i32
  }
  func.func @transform_1(%arg0: i32) -> (i32, i32) {
    %c0_i32 = arith.constant 0 : i32
    %c0_i32_0 = arith.constant 0 : i32
    %c0_i32_1 = arith.constant 0 : i32
    return %c0_i32, %c0_i32_0 : i32, i32
  }
  func.func @transform_2(%arg0: i32) -> (i32, i32) {
    %c0_i32 = arith.constant 0 : i32
    %c0_i32_0 = arith.constant 0 : i32
    %c0_i32_1 = arith.constant 0 : i32
    return %c0_i32, %c0_i32_0 : i32, i32
  }
  func.func @transform_3(%arg0: i32) -> (i32, i32) {
    %c0_i32 = arith.constant 0 : i32
    %c0_i32_0 = arith.constant 0 : i32
    %c0_i32_1 = arith.constant 0 : i32
    return %c0_i32, %c0_i32_0 : i32, i32
  }
  func.func @transform_4(%arg0: i32) -> (i32, i32) {
    %c0_i32 = arith.constant 0 : i32
    %c0_i32_0 = arith.constant 0 : i32
    %c0_i32_1 = arith.constant 0 : i32
    return %c0_i32, %c0_i32_0 : i32, i32
  }
  func.func @transform_5(%arg0: i32) -> (i32, i32) {
    %c0_i32 = arith.constant 0 : i32
    %c0_i32_0 = arith.constant 0 : i32
    return %arg0, %c0_i32 : i32, i32
  }
}

</mosaic_0001>

<llo_original>
// kernel: _run.1
$region0: #{_run.1}
  #allocation0 [shape = 'u32[]', space=smem, size = 0x4, offset = 0x4, fixed_abs, tag = 'smem constant byte address 0x4 - core index']
  #allocation1 [shape = 'u32[72,128]{1,0:T(1,128)}', space=vmem, size = 0x9000, scoped, tag = 'internal scratch']
  %s0 = inlined_call_operand.vmem [shape: bf16[16,128], index: 0, kind: input, shape index: {}]
  %s1 = inlined_call_operand.hbm [shape: bf16[128,128], index: 1, kind: input, shape index: {}]
  %s2 = inlined_call_operand.vmem [shape: f32[1,128], index: 2, kind: input, shape index: {}]
  %s3 = inlined_call_operand.hbm [shape: bf16[128,128], index: 3, kind: input, shape index: {}]
  %s4 = inlined_call_operand.vmem [shape: f32[1,128], index: 4, kind: input, shape index: {}]
  %s5 = inlined_call_operand.vmem [shape: f32[16,128], index: 5, kind: output, shape index: {}]
  %s6 = sld [smem:[#allocation0]]
  $region61: #{_run.1} parent=0
    _
  %s8 = ssub.s32 1, %s6
  %s9 = scalar_select 0, %s8, %s6
  $region1: #{_run.1} parent=0
    #allocation2 [shape = 'u8[32768]{0}', space=vmem, size = 0x8000, scoped, tag = 'input window, operand 1, single buffered']
    #allocation3 [shape = 's32[2]{0}', space=sflag, size = 0x8, scoped, tag = 'scoped memory for _run.1']
    #allocation4 [shape = 'u8[32768]{0}', space=vmem, size = 0x8000, scoped, tag = 'input window, operand 3, single buffered']
    #allocation5 [shape = 's32[1]{0}', space=sflag, size = 0x4, scoped, tag = 'scoped memory for _run.1']
    %10 = vsyncpa [#allocation3], 0
    %11 = vsyncpa [#allocation5], 0
    loop: start=0, step=1, limit=4
    $region2: #{_run.1} parent=1 // loop_pre_header
      _
    $region3: #{_run.1} parent=1 // loop_header
      %s13 = sphi 0, %s17
      %p14 = scmp.ge.s32.totalorder %s13, 4
      %s23 = sphi 0, %s25
      %s26 = sphi 0, %s23
      %s27 = sphi 0, %s26
      %s43 = sphi 0, %s27
      %s47 = sphi 0, %s47
      %s49 = sphi 0, %s47
      %s50 = sphi 0, %s49
      %s64 = sphi 0, %s50
      %s68 = sphi 0, %s68
      %s70 = sphi 0, %s68
      %s71 = sphi 0, %s70
      %s85 = sphi 0, %s71
      %s89 = sphi 0, %s89
      %s91 = sphi 0, %s89
      %s92 = sphi 0, %s91
      %s106 = sphi 0, %s92
      %s110 = sphi 0, %s110
      %s112 = sphi 0, %s110
      %s113 = sphi 0, %s112
      %s127 = sphi 0, %s113
      %s133 = sphi 0, %s135
      %s136 = sphi 0, %s133
      %s137 = sphi 0, %s136
      %s153 = sphi 0, %s137
    $region4: #{_run.1} parent=1 // loop_header_branch
      %16 = sbr.rel (%p14) target = $region8
    $region5: #{_run.1} parent=1 // loop_body
      %s18 = ssub.s32 %s13, 1
      %s19 = ssub.s32 %s13, 2
      %s20 = sadd.s32 %s13, 1
      %s21 = ssub.s32 %s13, %s20
      %p22 = scmp.eq.s32.totalorder %s21, 0
      %s24 = sadd.s32 %s23, 1
      %s25 = scalar_select %p22, %s23, %s24
      %p28 = pneg %p22
      %p29 = scmp.eq.s32.totalorder %s13, 1
      %p30 = por %p28, %p29
      %p31 = scmp.ne.s32.totalorder %s23, %s26
      %p32 = scmp.eq.s32.totalorder %s13, 0
      %p33 = por %p31, %p32
      %p34 = scmp.ne.s32.totalorder %s23, %s26
      %p35 = scmp.eq.s32.totalorder %s18, 1
      %p36 = por %p34, %p35
      %p37 = scmp.ne.s32.totalorder %s26, %s27
      %p38 = scmp.eq.s32.totalorder %s18, 0
      %p39 = por %p37, %p38
      %p40 = scmp.ne.s32.totalorder %s26, %s27
      %p41 = scmp.eq.s32.totalorder %s19, 1
      %p42 = por %p40, %p41
      %p44 = scmp.ne.s32.totalorder %s27, %s43
      %p45 = scmp.eq.s32.totalorder %s19, 0
      %p46 = por %p44, %p45
      %s48 = sadd.s32 %s47, 1
      %p51 = scmp.eq.s32.totalorder %s13, 1
      %p52 = scmp.ne.s32.totalorder %s47, %s49
      %p53 = scmp.eq.s32.totalorder %s13, 0
      %p54 = por %p52, %p53
      %p55 = scmp.ne.s32.totalorder %s47, %s49
      %p56 = scmp.eq.s32.totalorder %s18, 1
      %p57 = por %p55, %p56
      %p58 = scmp.ne.s32.totalorder %s49, %s50
      %p59 = scmp.eq.s32.totalorder %s18, 0
      %p60 = por %p58, %p59
      %p61 = scmp.ne.s32.totalorder %s49, %s50
      %p62 = scmp.eq.s32.totalorder %s19, 1
      %p63 = por %p61, %p62
      %p65 = scmp.ne.s32.totalorder %s50, %s64
      %p66 = scmp.eq.s32.totalorder %s19, 0
      %p67 = por %p65, %p66
      %s69 = sadd.s32 %s68, 1
      %p72 = scmp.eq.s32.totalorder %s13, 1
      %p73 = scmp.ne.s32.totalorder %s68, %s70
      %p74 = scmp.eq.s32.totalorder %s13, 0
      %p75 = por %p73, %p74
      %p76 = scmp.ne.s32.totalorder %s68, %s70
      %p77 = scmp.eq.s32.totalorder %s18, 1
      %p78 = por %p76, %p77
      %p79 = scmp.ne.s32.totalorder %s70, %s71
      %p80 = scmp.eq.s32.totalorder %s18, 0
      %p81 = por %p79, %p80
      %p82 = scmp.ne.s32.totalorder %s70, %s71
      %p83 = scmp.eq.s32.totalorder %s19, 1
      %p84 = por %p82, %p83
      %p86 = scmp.ne.s32.totalorder %s71, %s85
      %p87 = scmp.eq.s32.totalorder %s19, 0
      %p88 = por %p86, %p87
      %s90 = sadd.s32 %s89, 1
      %p93 = scmp.eq.s32.totalorder %s13, 1
      %p94 = scmp.ne.s32.totalorder %s89, %s91
      %p95 = scmp.eq.s32.totalorder %s13, 0
      %p96 = por %p94, %p95
      %p97 = scmp.ne.s32.totalorder %s89, %s91
      %p98 = scmp.eq.s32.totalorder %s18, 1
      %p99 = por %p97, %p98
      %p100 = scmp.ne.s32.totalorder %s91, %s92
      %p101 = scmp.eq.s32.totalorder %s18, 0
      %p102 = por %p100, %p101
      %p103 = scmp.ne.s32.totalorder %s91, %s92
      %p104 = scmp.eq.s32.totalorder %s19, 1
      %p105 = por %p103, %p104
      %p107 = scmp.ne.s32.totalorder %s92, %s106
      %p108 = scmp.eq.s32.totalorder %s19, 0
      %p109 = por %p107, %p108
      %s111 = sadd.s32 %s110, 1
      %p114 = scmp.eq.s32.totalorder %s13, 1
      %p115 = scmp.ne.s32.totalorder %s110, %s112
      %p116 = scmp.eq.s32.totalorder %s13, 0
      %p117 = por %p115, %p116
      %p118 = scmp.ne.s32.totalorder %s110, %s112
      %p119 = scmp.eq.s32.totalorder %s18, 1
      %p120 = por %p118, %p119
      %p121 = scmp.ne.s32.totalorder %s112, %s113
      %p122 = scmp.eq.s32.totalorder %s18, 0
      %p123 = por %p121, %p122
      %p124 = scmp.ne.s32.totalorder %s112, %s113
      %p125 = scmp.eq.s32.totalorder %s19, 1
      %p126 = por %p124, %p125
      %p128 = scmp.ne.s32.totalorder %s113, %s127
      %p129 = scmp.eq.s32.totalorder %s19, 0
      %p130 = por %p128, %p129
      %s131 = ssub.s32 %s13, %s20
      %p132 = scmp.eq.s32.totalorder %s131, 0
      %s134 = sadd.s32 %s133, 1
      %s135 = scalar_select %p132, %s133, %s134
      %p138 = pneg %p132
      %p139 = scmp.eq.s32.totalorder %s13, 1
      %p140 = por %p138, %p139
      %p141 = scmp.ne.s32.totalorder %s133, %s136
      %p142 = scmp.eq.s32.totalorder %s13, 0
      %p143 = por %p141, %p142
      %p144 = scmp.ne.s32.totalorder %s133, %s136
      %p145 = scmp.eq.s32.totalorder %s18, 1
      %p146 = por %p144, %p145
      %p147 = scmp.ne.s32.totalorder %s136, %s137
      %p148 = scmp.eq.s32.totalorder %s18, 0
      %p149 = por %p147, %p148
      %p150 = scmp.ne.s32.totalorder %s136, %s137
      %p151 = scmp.eq.s32.totalorder %s19, 1
      %p152 = por %p150, %p151
      %p154 = scmp.ne.s32.totalorder %s137, %s153
      %p155 = scmp.eq.s32.totalorder %s19, 0
      %p156 = por %p154, %p155
      %p157 = scmp.le.s32.totalorder 1, %s13
      %p158 = scmp.lt.s32.totalorder %s13, 3
      %p159 = pnand %p157, %p158
      %p160 = pneg %p159
      // Predicated region
      $region9: #{_run.1} parent=5 // pred_check
        _
      $region10: #{_run.1} parent=5 // pred_check_branch
        %162 = sbr.rel (%p159) target = $region12
      $region11: #{_run.1} parent=5 // pred_region
        %s163 = ssub.s32 %s13, 1
        // Predicated region
        $region13: #{_run.1} parent=11 // pred_check
          %p164 = pneg %p60
        $region14: #{_run.1} parent=11 // pred_check_branch
          %166 = sbr.rel (%p164) target = $region16
        $region15: #{_run.1} parent=11 // pred_region
          %168 = vsyncadd [#allocation3], 0
          %s169 = sshll.u32 %s1, 4
          %s170 = int_to_ptr.hbm [resolvable:$true] %s169
          %s171 = sshll.u32 [#allocation2], 4
          %s172 = int_to_ptr.vmem [resolvable:$true] %s171
          %177 = dma.hbm_to_vmem [thread:$0]  %s170, 1024, %s172, [#allocation3], 64, 64, 4
        $region16: #{_run.1} parent=11 // pred_fallthru
          _
        // Predicated region
        $region17: #{_run.1} parent=11 // pred_check
          %p178 = pneg %p81
        $region18: #{_run.1} parent=11 // pred_check_branch
          %180 = sbr.rel (%p178) target = $region20
        $region19: #{_run.1} parent=11 // pred_region
          _
        $region20: #{_run.1} parent=11 // pred_fallthru
          _
        // Predicated region
        $region21: #{_run.1} parent=11 // pred_check
          %p181 = pneg %p102
        $region22: #{_run.1} parent=11 // pred_check_branch
          %183 = sbr.rel (%p181) target = $region24
        $region23: #{_run.1} parent=11 // pred_region
          %185 = vsyncadd [#allocation5], 0
          %s186 = sshll.u32 %s3, 4
          %s187 = int_to_ptr.hbm [resolvable:$true] %s186
          %s188 = sshll.u32 [#allocation4], 4
          %s189 = int_to_ptr.vmem [resolvable:$true] %s188
          %194 = dma.hbm_to_vmem [thread:$0]  %s187, 1024, %s189, [#allocation5], 64, 64, 4
        $region24: #{_run.1} parent=11 // pred_fallthru
          _
        // Predicated region
        $region25: #{_run.1} parent=11 // pred_check
          %p195 = pneg %p123
        $region26: #{_run.1} parent=11 // pred_check_branch
          %197 = sbr.rel (%p195) target = $region28
        $region27: #{_run.1} parent=11 // pred_region
          _
        $region28: #{_run.1} parent=11 // pred_fallthru
          _
      $region12: #{_run.1} parent=5 // pred_fallthru
        _
      %p198 = scmp.lt.s32.totalorder %s13, 2
      // Predicated region
      $region29: #{_run.1} parent=5 // pred_check
        %p199 = pneg %p198
      $region30: #{_run.1} parent=5 // pred_check_branch
        %201 = sbr.rel (%p199) target = $region32
      $region31: #{_run.1} parent=5 // pred_region
        // Predicated region
        $region33: #{_run.1} parent=31 // pred_check
          %p202 = pneg %p33
        $region34: #{_run.1} parent=31 // pred_check_branch
          %204 = sbr.rel (%p202) target = $region36
        $region35: #{_run.1} parent=31 // pred_region
          %p205 = scmp.lt.s32.totalorder %s13, 1
          %s206 = scalar_select %p205, %s13, 1
          %s207 = smul.addr %s206, 4
          %s208 = scalar_lea.vmem %s0, %s207
        $region36: #{_run.1} parent=31 // pred_fallthru
          _
      $region32: #{_run.1} parent=5 // pred_fallthru
        _
      %p209 = scmp.le.s32.totalorder 1, %s13
      %p210 = scmp.lt.s32.totalorder %s13, 3
      %p211 = pnand %p209, %p210
      %p212 = pneg %p211
      // Predicated region
      $region37: #{_run.1} parent=5 // pred_check
        _
      $region38: #{_run.1} parent=5 // pred_check_branch
        %214 = sbr.rel (%p211) target = $region40
      $region39: #{_run.1} parent=5 // pred_region
        %s215 = ssub.s32 %s13, 1
        // Predicated region
        $region41: #{_run.1} parent=39 // pred_check
          %p216 = pneg %p60
        $region42: #{_run.1} parent=39 // pred_check_branch
          %218 = sbr.rel (%p216) target = $region44
        $region43: #{_run.1} parent=39 // pred_region
          %220 = dma.done [#allocation3], 1024
        $region44: #{_run.1} parent=39 // pred_fallthru
          _
        // Predicated region
        $region45: #{_run.1} parent=39 // pred_check
          %p221 = pneg %p102
        $region46: #{_run.1} parent=39 // pred_check_branch
          %223 = sbr.rel (%p221) target = $region48
        $region47: #{_run.1} parent=39 // pred_region
          %225 = dma.done [#allocation5], 1024
        $region48: #{_run.1} parent=39 // pred_fallthru
          _
        %p226 = scmp.lt.s32.totalorder %s18, 1
        %s227 = scalar_select %p226, %s18, 1
        %s228 = smul.addr %s227, 4
        %s229 = scalar_lea.vmem %s0, %s228
        %p230 = pneg %p39
        %p231 = pneg %p36
        %p232 = pneg %p60
        %p233 = pneg %p57
        %p234 = pneg %p81
        %p235 = pneg %p78
        %p236 = pneg %p102
        %p237 = pneg %p99
        %p238 = pneg %p123
        %p239 = pneg %p120
        %p240 = pneg %p149
        %p241 = pneg %p146
        %p242 = scmp.lt.s32.totalorder %s18, 1
        %s243 = scalar_select %p242, %s18, 1
        %s244 = smul.addr %s243, 8
        %s245 = scalar_lea.vmem %s5, %s244
        %p246 = scmp.lt.s32.totalorder %s18, 1
        %s247 = scalar_select %p246, %s18, 1
        %s248 = smul.addr %s247, 4
        %s249 = scalar_lea.vmem %s0, %s248
        %p250 = scmp.lt.s32.totalorder %s18, 1
        %s251 = scalar_select %p250, %s18, 1
        %s252 = smul.addr %s251, 8
        %s253 = scalar_lea.vmem %s5, %s252
        %v254 = vld [vmem:[%s249] sm:$0xf]
        %v255 = vld [vmem:[#allocation2] sm:$0xf]
        %v256 = vld [vmem:[#allocation2 + $0x4] sm:$0xf]
        %v257 = vld [vmem:[#allocation2 + $0x8] sm:$0xf]
        %v258 = vld [vmem:[#allocation2 + $0xc] sm:$0xf]
        %v259 = vld [vmem:[#allocation2 + $0x10] sm:$0xf]
        %v260 = vld [vmem:[#allocation2 + $0x14] sm:$0xf]
        %v261 = vld [vmem:[#allocation2 + $0x18] sm:$0xf]
        %v262 = vld [vmem:[#allocation2 + $0x1c] sm:$0xf]
        %v263 = vld [vmem:[#allocation2 + $0x20] sm:$0xf]
        %v264 = vld [vmem:[#allocation2 + $0x24] sm:$0xf]
        %v265 = vld [vmem:[#allocation2 + $0x28] sm:$0xf]
        %v266 = vld [vmem:[#allocation2 + $0x2c] sm:$0xf]
        %v267 = vld [vmem:[#allocation2 + $0x30] sm:$0xf]
        %v268 = vld [vmem:[#allocation2 + $0x34] sm:$0xf]
        %v269 = vld [vmem:[#allocation2 + $0x38] sm:$0xf]
        %v270 = vld [vmem:[#allocation2 + $0x3c] sm:$0xf]
        %v271 = vld [vmem:[%s2] sm:$0x1]
        %v273 = vperm.slane %v271, 0
        %v291 = vunpack.c.l.b16 %v255
        %v292 = vunpack.c.l.b16 %v256
        %v293 = vunpack.c.l.b16 %v257
        %v294 = vunpack.c.l.b16 %v258
        %v295 = vunpack.c.l.b16 %v259
        %v296 = vunpack.c.l.b16 %v260
        %v297 = vunpack.c.l.b16 %v261
        %v298 = vunpack.c.l.b16 %v262
        %v299 = vunpack.c.l.b16 %v263
        %v300 = vunpack.c.l.b16 %v264
        %v301 = vunpack.c.l.b16 %v265
        %v302 = vunpack.c.l.b16 %v266
        %v303 = vunpack.c.l.b16 %v267
        %v304 = vunpack.c.l.b16 %v268
        %v305 = vunpack.c.l.b16 %v269
        %v306 = vunpack.c.l.b16 %v270
        %v307 = vpack.c.b16 %v292, %v291
        %v308 = vpack.c.b16 %v294, %v293
        %v309 = vpack.c.b16 %v296, %v295
        %v310 = vpack.c.b16 %v298, %v297
        %v311 = vpack.c.b16 %v300, %v299
        %v312 = vpack.c.b16 %v302, %v301
        %v313 = vpack.c.b16 %v304, %v303
        %v314 = vpack.c.b16 %v306, %v305
        %323 = vmatpush.bf16.msra.mxu0 %v314
        %324 = vmatpush.bf16.msra.mxu0 %v313
        %325 = vmatpush.bf16.msra.mxu0 %v312
        %326 = vmatpush.bf16.msra.mxu0 %v311
        %327 = vmatpush.bf16.msra.mxu0 %v310
        %328 = vmatpush.bf16.msra.mxu0 %v309
        %329 = vmatpush.bf16.msra.mxu0 %v308
        %330 = vmatpush.bf16.msra.mxu0 %v307
        %331 = vmatmul.bf16.gmra.mxu0 %v254
        %v332 = vpop.f32.mrf.mxu0
        %v333 = vadd.f32 %v273, %v332
        %v334 = vpop.f32.mrf.mxu0
        %335 = vdwg.mxu0
        %v336 = vmax.f32 %v333, 0.0
        %v337 = vpack.c.bf16 %v336, %v336
        %v338 = vld [vmem:[#allocation4] sm:$0xf]
        %v339 = vld [vmem:[#allocation4 + $0x4] sm:$0xf]
        %v340 = vld [vmem:[#allocation4 + $0x8] sm:$0xf]
        %v341 = vld [vmem:[#allocation4 + $0xc] sm:$0xf]
        %v342 = vld [vmem:[#allocation4 + $0x10] sm:$0xf]
        %v343 = vld [vmem:[#allocation4 + $0x14] sm:$0xf]
        %v344 = vld [vmem:[#allocation4 + $0x18] sm:$0xf]
        %v345 = vld [vmem:[#allocation4 + $0x1c] sm:$0xf]
        %v346 = vld [vmem:[#allocation4 + $0x20] sm:$0xf]
        %v347 = vld [vmem:[#allocation4 + $0x24] sm:$0xf]
        %v348 = vld [vmem:[#allocation4 + $0x28] sm:$0xf]
        %v349 = vld [vmem:[#allocation4 + $0x2c] sm:$0xf]
        %v350 = vld [vmem:[#allocation4 + $0x30] sm:$0xf]
        %v351 = vld [vmem:[#allocation4 + $0x34] sm:$0xf]
        %v352 = vld [vmem:[#allocation4 + $0x38] sm:$0xf]
        %v353 = vld [vmem:[#allocation4 + $0x3c] sm:$0xf]
        %v354 = vld [vmem:[%s4] sm:$0x1]
        %v356 = vperm.slane %v354, 0
        %v374 = vunpack.c.l.b16 %v338
        %v375 = vunpack.c.l.b16 %v339
        %v376 = vunpack.c.l.b16 %v340
        %v377 = vunpack.c.l.b16 %v341
        %v378 = vunpack.c.l.b16 %v342
        %v379 = vunpack.c.l.b16 %v343
        %v380 = vunpack.c.l.b16 %v344
        %v381 = vunpack.c.l.b16 %v345
        %v382 = vunpack.c.l.b16 %v346
        %v383 = vunpack.c.l.b16 %v347
        %v384 = vunpack.c.l.b16 %v348
        %v385 = vunpack.c.l.b16 %v349
        %v386 = vunpack.c.l.b16 %v350
        %v387 = vunpack.c.l.b16 %v351
        %v388 = vunpack.c.l.b16 %v352
        %v389 = vunpack.c.l.b16 %v353
        %v390 = vpack.c.b16 %v375, %v374
        %v391 = vpack.c.b16 %v377, %v376
        %v392 = vpack.c.b16 %v379, %v378
        %v393 = vpack.c.b16 %v381, %v380
        %v394 = vpack.c.b16 %v383, %v382
        %v395 = vpack.c.b16 %v385, %v384
        %v396 = vpack.c.b16 %v387, %v386
        %v397 = vpack.c.b16 %v389, %v388
        %406 = vmatpush.bf16.msra.mxu0 %v397
        %407 = vmatpush.bf16.msra.mxu0 %v396
        %408 = vmatpush.bf16.msra.mxu0 %v395
        %409 = vmatpush.bf16.msra.mxu0 %v394
        %410 = vmatpush.bf16.msra.mxu0 %v393
        %411 = vmatpush.bf16.msra.mxu0 %v392
        %412 = vmatpush.bf16.msra.mxu0 %v391
        %413 = vmatpush.bf16.msra.mxu0 %v390
        %414 = vmatmul.bf16.gmra.mxu0 %v337
        %v415 = vpop.f32.mrf.mxu0
        %v416 = vadd.f32 %v356, %v415
        %v417 = vpop.f32.mrf.mxu0
        %418 = vdwg.mxu0
        %419 = vst [vmem:[%s253] sm:$0xff] %v416
        %p420 = scmp.lt.s32.totalorder %s18, 1
        %s421 = scalar_select %p420, %s18, 1
        %s422 = smul.addr %s421, 8
        %s423 = scalar_lea.vmem %s5, %s422
        // Predicated region
        $region49: #{_run.1} parent=39 // pred_check
          %p424 = pneg %p146
        $region50: #{_run.1} parent=39 // pred_check_branch
          %426 = sbr.rel (%p424) target = $region52
        $region51: #{_run.1} parent=39 // pred_region
          _
        $region52: #{_run.1} parent=39 // pred_fallthru
          _
      $region40: #{_run.1} parent=5 // pred_fallthru
        _
      %p427 = scmp.le.s32.totalorder 2, %s13
      // Predicated region
      $region53: #{_run.1} parent=5 // pred_check
        %p428 = pneg %p427
      $region54: #{_run.1} parent=5 // pred_check_branch
        %430 = sbr.rel (%p428) target = $region56
      $region55: #{_run.1} parent=5 // pred_region
        %s431 = ssub.s32 %s13, 2
        // Predicated region
        $region57: #{_run.1} parent=55 // pred_check
          %p432 = pneg %p152
        $region58: #{_run.1} parent=55 // pred_check_branch
          %434 = sbr.rel (%p432) target = $region60
        $region59: #{_run.1} parent=55 // pred_region
          %p435 = scmp.lt.s32.totalorder %s19, 1
          %s436 = scalar_select %p435, %s19, 1
          %s437 = smul.addr %s436, 8
          %s438 = scalar_lea.vmem %s5, %s437
        $region60: #{_run.1} parent=55 // pred_fallthru
          _
      $region56: #{_run.1} parent=5 // pred_fallthru
        _
    $region6: #{_run.1} parent=1 // loop_footer
      %s17 = sadd.s32 1, %s13
    $region7: #{_run.1} parent=1 // loop_footer_branch
      %12 = sbr.rel target = $region3
    $region8: #{_run.1} parent=1 // loop_exit
      _
    %439 = vsyncpa [#allocation3], 1
    %s440 = scalar_lea.sflag [#allocation3], 1
    %441 = vsyncpa %s440, 1
    %442 = vsyncpa [#allocation5], 1

// kernel: _run.1
$region0: #{_run.1}
  #allocation0 [shape = 'u32[]', space=smem, size = 0x4, offset = 0x4, fixed_abs, tag = 'smem constant byte address 0x4 - core index']
  #allocation1 [shape = 'u32[72,128]{1,0:T(1,128)}', space=vmem, size = 0x9000, scoped, tag = 'internal scratch']
  %s0 = inlined_call_operand.vmem [shape: bf16[16,128], index: 0, kind: input, shape index: {}]
  %s1 = inlined_call_operand.hbm [shape: bf16[128,128], index: 1, kind: input, shape index: {}]
  %s2 = inlined_call_operand.vmem [shape: f32[1,128], index: 2, kind: input, shape index: {}]
  %s3 = inlined_call_operand.hbm [shape: bf16[128,128], index: 3, kind: input, shape index: {}]
  %s4 = inlined_call_operand.vmem [shape: f32[1,128], index: 4, kind: input, shape index: {}]
  %s5 = inlined_call_operand.vmem [shape: f32[16,128], index: 5, kind: output, shape index: {}]
  %s6 = sld [smem:[#allocation0]]
  $region61: #{_run.1} parent=0
    _
  %s8 = ssub.s32 1, %s6
  %s9 = scalar_select 0, %s8, %s6
  $region1: #{_run.1} parent=0
    #allocation2 [shape = 'u8[32768]{0}', space=vmem, size = 0x8000, scoped, tag = 'input window, operand 1, single buffered']
    #allocation3 [shape = 's32[2]{0}', space=sflag, size = 0x8, scoped, tag = 'scoped memory for _run.1']
    #allocation4 [shape = 'u8[32768]{0}', space=vmem, size = 0x8000, scoped, tag = 'input window, operand 3, single buffered']
    #allocation5 [shape = 's32[1]{0}', space=sflag, size = 0x4, scoped, tag = 'scoped memory for _run.1']
    %10 = vsyncpa [#allocation3], 0
    %11 = vsyncpa [#allocation5], 0
    loop: start=0, step=1, limit=4
    $region2: #{_run.1} parent=1 // loop_pre_header
      _
    $region3: #{_run.1} parent=1 // loop_header
      %s13 = sphi 0, %s17
      %p14 = scmp.ge.s32.totalorder %s13, 4
      %s23 = sphi 0, %s25
      %s26 = sphi 0, %s23
      %s27 = sphi 0, %s26
      %s43 = sphi 0, %s27
      %s47 = sphi 0, %s47
      %s49 = sphi 0, %s47
      %s50 = sphi 0, %s49
      %s64 = sphi 0, %s50
      %s68 = sphi 0, %s68
      %s70 = sphi 0, %s68
      %s71 = sphi 0, %s70
      %s85 = sphi 0, %s71
      %s89 = sphi 0, %s89
      %s91 = sphi 0, %s89
      %s92 = sphi 0, %s91
      %s106 = sphi 0, %s92
      %s110 = sphi 0, %s110
      %s112 = sphi 0, %s110
      %s113 = sphi 0, %s112
      %s127 = sphi 0, %s113
      %s133 = sphi 0, %s135
      %s136 = sphi 0, %s133
      %s137 = sphi 0, %s136
      %s153 = sphi 0, %s137
    $region4: #{_run.1} parent=1 // loop_header_branch
      %16 = sbr.rel (%p14) target = $region8
    $region5: #{_run.1} parent=1 // loop_body
      %s18 = ssub.s32 %s13, 1
      %s19 = ssub.s32 %s13, 2
      %s20 = sadd.s32 %s13, 1
      %s21 = ssub.s32 %s13, %s20
      %p22 = scmp.eq.s32.totalorder %s21, 0
      %s24 = sadd.s32 %s23, 1
      %s25 = scalar_select %p22, %s23, %s24
      %p28 = pneg %p22
      %p29 = scmp.eq.s32.totalorder %s13, 1
      %p30 = por %p28, %p29
      %p31 = scmp.ne.s32.totalorder %s23, %s26
      %p32 = scmp.eq.s32.totalorder %s13, 0
      %p33 = por %p31, %p32
      %p34 = scmp.ne.s32.totalorder %s23, %s26
      %p35 = scmp.eq.s32.totalorder %s18, 1
      %p36 = por %p34, %p35
      %p37 = scmp.ne.s32.totalorder %s26, %s27
      %p38 = scmp.eq.s32.totalorder %s18, 0
      %p39 = por %p37, %p38
      %p40 = scmp.ne.s32.totalorder %s26, %s27
      %p41 = scmp.eq.s32.totalorder %s19, 1
      %p42 = por %p40, %p41
      %p44 = scmp.ne.s32.totalorder %s27, %s43
      %p45 = scmp.eq.s32.totalorder %s19, 0
      %p46 = por %p44, %p45
      %s48 = sadd.s32 %s47, 1
      %p51 = scmp.eq.s32.totalorder %s13, 1
      %p52 = scmp.ne.s32.totalorder %s47, %s49
      %p53 = scmp.eq.s32.totalorder %s13, 0
      %p54 = por %p52, %p53
      %p55 = scmp.ne.s32.totalorder %s47, %s49
      %p56 = scmp.eq.s32.totalorder %s18, 1
      %p57 = por %p55, %p56
      %p58 = scmp.ne.s32.totalorder %s49, %s50
      %p59 = scmp.eq.s32.totalorder %s18, 0
      %p60 = por %p58, %p59
      %p61 = scmp.ne.s32.totalorder %s49, %s50
      %p62 = scmp.eq.s32.totalorder %s19, 1
      %p63 = por %p61, %p62
      %p65 = scmp.ne.s32.totalorder %s50, %s64
      %p66 = scmp.eq.s32.totalorder %s19, 0
      %p67 = por %p65, %p66
      %s69 = sadd.s32 %s68, 1
      %p72 = scmp.eq.s32.totalorder %s13, 1
      %p73 = scmp.ne.s32.totalorder %s68, %s70
      %p74 = scmp.eq.s32.totalorder %s13, 0
      %p75 = por %p73, %p74
      %p76 = scmp.ne.s32.totalorder %s68, %s70
      %p77 = scmp.eq.s32.totalorder %s18, 1
      %p78 = por %p76, %p77
      %p79 = scmp.ne.s32.totalorder %s70, %s71
      %p80 = scmp.eq.s32.totalorder %s18, 0
      %p81 = por %p79, %p80
      %p82 = scmp.ne.s32.totalorder %s70, %s71
      %p83 = scmp.eq.s32.totalorder %s19, 1
      %p84 = por %p82, %p83
      %p86 = scmp.ne.s32.totalorder %s71, %s85
      %p87 = scmp.eq.s32.totalorder %s19, 0
      %p88 = por %p86, %p87
      %s90 = sadd.s32 %s89, 1
      %p93 = scmp.eq.s32.totalorder %s13, 1
      %p94 = scmp.ne.s32.totalorder %s89, %s91
      %p95 = scmp.eq.s32.totalorder %s13, 0
      %p96 = por %p94, %p95
      %p97 = scmp.ne.s32.totalorder %s89, %s91
      %p98 = scmp.eq.s32.totalorder %s18, 1
      %p99 = por %p97, %p98
      %p100 = scmp.ne.s32.totalorder %s91, %s92
      %p101 = scmp.eq.s32.totalorder %s18, 0
      %p102 = por %p100, %p101
      %p103 = scmp.ne.s32.totalorder %s91, %s92
      %p104 = scmp.eq.s32.totalorder %s19, 1
      %p105 = por %p103, %p104
      %p107 = scmp.ne.s32.totalorder %s92, %s106
      %p108 = scmp.eq.s32.totalorder %s19, 0
      %p109 = por %p107, %p108
      %s111 = sadd.s32 %s110, 1
      %p114 = scmp.eq.s32.totalorder %s13, 1
      %p115 = scmp.ne.s32.totalorder %s110, %s112
      %p116 = scmp.eq.s32.totalorder %s13, 0
      %p117 = por %p115, %p116
      %p118 = scmp.ne.s32.totalorder %s110, %s112
      %p119 = scmp.eq.s32.totalorder %s18, 1
      %p120 = por %p118, %p119
      %p121 = scmp.ne.s32.totalorder %s112, %s113
      %p122 = scmp.eq.s32.totalorder %s18, 0
      %p123 = por %p121, %p122
      %p124 = scmp.ne.s32.totalorder %s112, %s113
      %p125 = scmp.eq.s32.totalorder %s19, 1
      %p126 = por %p124, %p125
      %p128 = scmp.ne.s32.totalorder %s113, %s127
      %p129 = scmp.eq.s32.totalorder %s19, 0
      %p130 = por %p128, %p129
      %s131 = ssub.s32 %s13, %s20
      %p132 = scmp.eq.s32.totalorder %s131, 0
      %s134 = sadd.s32 %s133, 1
      %s135 = scalar_select %p132, %s133, %s134
      %p138 = pneg %p132
      %p139 = scmp.eq.s32.totalorder %s13, 1
      %p140 = por %p138, %p139
      %p141 = scmp.ne.s32.totalorder %s133, %s136
      %p142 = scmp.eq.s32.totalorder %s13, 0
      %p143 = por %p141, %p142
      %p144 = scmp.ne.s32.totalorder %s133, %s136
      %p145 = scmp.eq.s32.totalorder %s18, 1
      %p146 = por %p144, %p145
      %p147 = scmp.ne.s32.totalorder %s136, %s137
      %p148 = scmp.eq.s32.totalorder %s18, 0
      %p149 = por %p147, %p148
      %p150 = scmp.ne.s32.totalorder %s136, %s137
      %p151 = scmp.eq.s32.totalorder %s19, 1
      %p152 = por %p150, %p151
      %p154 = scmp.ne.s32.totalorder %s137, %s153
      %p155 = scmp.eq.s32.totalorder %s19, 0
      %p156 = por %p154, %p155
      %p157 = scmp.le.s32.totalorder 1, %s13
      %p158 = scmp.lt.s32.totalorder %s13, 3
      %p159 = pnand %p157, %p158
      %p160 = pneg %p159
      // Predicated region
      $region9: #{_run.1} parent=5 // pred_check
        _
      $region10: #{_run.1} parent=5 // pred_check_branch
        %162 = sbr.rel (%p159) target = $region12
      $region11: #{_run.1} parent=5 // pred_region
        %s163 = ssub.s32 %s13, 1
        // Predicated region
        $region13: #{_run.1} parent=11 // pred_check
          %p164 = pneg %p60
        $region14: #{_run.1} parent=11 // pred_check_branch
          %166 = sbr.rel (%p164) target = $region16
        $region15: #{_run.1} parent=11 // pred_region
          %168 = vsyncadd [#allocation3], 0
          %s169 = sshll.u32 %s1, 4
          %s170 = int_to_ptr.hbm [resolvable:$true] %s169
          %s171 = sshll.u32 [#allocation2], 4
          %s172 = int_to_ptr.vmem [resolvable:$true] %s171
          %177 = dma.hbm_to_vmem [thread:$0]  %s170, 1024, %s172, [#allocation3], 64, 64, 4
        $region16: #{_run.1} parent=11 // pred_fallthru
          _
        // Predicated region
        $region17: #{_run.1} parent=11 // pred_check
          %p178 = pneg %p81
        $region18: #{_run.1} parent=11 // pred_check_branch
          %180 = sbr.rel (%p178) target = $region20
        $region19: #{_run.1} parent=11 // pred_region
          _
        $region20: #{_run.1} parent=11 // pred_fallthru
          _
        // Predicated region
        $region21: #{_run.1} parent=11 // pred_check
          %p181 = pneg %p102
        $region22: #{_run.1} parent=11 // pred_check_branch
          %183 = sbr.rel (%p181) target = $region24
        $region23: #{_run.1} parent=11 // pred_region
          %185 = vsyncadd [#allocation5], 0
          %s186 = sshll.u32 %s3, 4
          %s187 = int_to_ptr.hbm [resolvable:$true] %s186
          %s188 = sshll.u32 [#allocation4], 4
          %s189 = int_to_ptr.vmem [resolvable:$true] %s188
          %194 = dma.hbm_to_vmem [thread:$0]  %s187, 1024, %s189, [#allocation5], 64, 64, 4
        $region24: #{_run.1} parent=11 // pred_fallthru
          _
        // Predicated region
        $region25: #{_run.1} parent=11 // pred_check
          %p195 = pneg %p123
        $region26: #{_run.1} parent=11 // pred_check_branch
          %197 = sbr.rel (%p195) target = $region28
        $region27: #{_run.1} parent=11 // pred_region
          _
        $region28: #{_run.1} parent=11 // pred_fallthru
          _
      $region12: #{_run.1} parent=5 // pred_fallthru
        _
      %p198 = scmp.lt.s32.totalorder %s13, 2
      // Predicated region
      $region29: #{_run.1} parent=5 // pred_check
        %p199 = pneg %p198
      $region30: #{_run.1} parent=5 // pred_check_branch
        %201 = sbr.rel (%p199) target = $region32
      $region31: #{_run.1} parent=5 // pred_region
        // Predicated region
        $region33: #{_run.1} parent=31 // pred_check
          %p202 = pneg %p33
        $region34: #{_run.1} parent=31 // pred_check_branch
          %204 = sbr.rel (%p202) target = $region36
        $region35: #{_run.1} parent=31 // pred_region
          %p205 = scmp.lt.s32.totalorder %s13, 1
          %s206 = scalar_select %p205, %s13, 1
          %s207 = smul.addr %s206, 4
          %s208 = scalar_lea.vmem %s0, %s207
        $region36: #{_run.1} parent=31 // pred_fallthru
          _
      $region32: #{_run.1} parent=5 // pred_fallthru
        _
      %p209 = scmp.le.s32.totalorder 1, %s13
      %p210 = scmp.lt.s32.totalorder %s13, 3
      %p211 = pnand %p209, %p210
      %p212 = pneg %p211
      // Predicated region
      $region37: #{_run.1} parent=5 // pred_check
        _
      $region38: #{_run.1} parent=5 // pred_check_branch
        %214 = sbr.rel (%p211) target = $region40
      $region39: #{_run.1} parent=5 // pred_region
        %s215 = ssub.s32 %s13, 1
        // Predicated region
        $region41: #{_run.1} parent=39 // pred_check
          %p216 = pneg %p60
        $region42: #{_run.1} parent=39 // pred_check_branch
          %218 = sbr.rel (%p216) target = $region44
        $region43: #{_run.1} parent=39 // pred_region
          %220 = dma.done [#allocation3], 1024
        $region44: #{_run.1} parent=39 // pred_fallthru
          _
        // Predicated region
        $region45: #{_run.1} parent=39 // pred_check
          %p221 = pneg %p102
        $region46: #{_run.1} parent=39 // pred_check_branch
          %223 = sbr.rel (%p221) target = $region48
        $region47: #{_run.1} parent=39 // pred_region
          %225 = dma.done [#allocation5], 1024
        $region48: #{_run.1} parent=39 // pred_fallthru
          _
        %p226 = scmp.lt.s32.totalorder %s18, 1
        %s227 = scalar_select %p226, %s18, 1
        %s228 = smul.addr %s227, 4
        %s229 = scalar_lea.vmem %s0, %s228
        %p230 = pneg %p39
        %p231 = pneg %p36
        %p232 = pneg %p60
        %p233 = pneg %p57
        %p234 = pneg %p81
        %p235 = pneg %p78
        %p236 = pneg %p102
        %p237 = pneg %p99
        %p238 = pneg %p123
        %p239 = pneg %p120
        %p240 = pneg %p149
        %p241 = pneg %p146
        %p242 = scmp.lt.s32.totalorder %s18, 1
        %s243 = scalar_select %p242, %s18, 1
        %s244 = smul.addr %s243, 8
        %s245 = scalar_lea.vmem %s5, %s244
        %p246 = scmp.lt.s32.totalorder %s18, 1
        %s247 = scalar_select %p246, %s18, 1
        %s248 = smul.addr %s247, 4
        %s249 = scalar_lea.vmem %s0, %s248
        %p250 = scmp.lt.s32.totalorder %s18, 1
        %s251 = scalar_select %p250, %s18, 1
        %s252 = smul.addr %s251, 8
        %s253 = scalar_lea.vmem %s5, %s252
        %v254 = vld [vmem:[%s249] sm:$0xf]
        %v255 = vld [vmem:[#allocation2] sm:$0xf]
        %v256 = vld [vmem:[#allocation2 + $0x4] sm:$0xf]
        %v257 = vld [vmem:[#allocation2 + $0x8] sm:$0xf]
        %v258 = vld [vmem:[#allocation2 + $0xc] sm:$0xf]
        %v259 = vld [vmem:[#allocation2 + $0x10] sm:$0xf]
        %v260 = vld [vmem:[#allocation2 + $0x14] sm:$0xf]
        %v261 = vld [vmem:[#allocation2 + $0x18] sm:$0xf]
        %v262 = vld [vmem:[#allocation2 + $0x1c] sm:$0xf]
        %v263 = vld [vmem:[#allocation2 + $0x20] sm:$0xf]
        %v264 = vld [vmem:[#allocation2 + $0x24] sm:$0xf]
        %v265 = vld [vmem:[#allocation2 + $0x28] sm:$0xf]
        %v266 = vld [vmem:[#allocation2 + $0x2c] sm:$0xf]
        %v267 = vld [vmem:[#allocation2 + $0x30] sm:$0xf]
        %v268 = vld [vmem:[#allocation2 + $0x34] sm:$0xf]
        %v269 = vld [vmem:[#allocation2 + $0x38] sm:$0xf]
        %v270 = vld [vmem:[#allocation2 + $0x3c] sm:$0xf]
        %v271 = vld [vmem:[%s2] sm:$0x1]
        %v273 = vperm.slane %v271, 0
        %v291 = vunpack.c.l.b16 %v255
        %v292 = vunpack.c.l.b16 %v256
        %v293 = vunpack.c.l.b16 %v257
        %v294 = vunpack.c.l.b16 %v258
        %v295 = vunpack.c.l.b16 %v259
        %v296 = vunpack.c.l.b16 %v260
        %v297 = vunpack.c.l.b16 %v261
        %v298 = vunpack.c.l.b16 %v262
        %v299 = vunpack.c.l.b16 %v263
        %v300 = vunpack.c.l.b16 %v264
        %v301 = vunpack.c.l.b16 %v265
        %v302 = vunpack.c.l.b16 %v266
        %v303 = vunpack.c.l.b16 %v267
        %v304 = vunpack.c.l.b16 %v268
        %v305 = vunpack.c.l.b16 %v269
        %v306 = vunpack.c.l.b16 %v270
        %v307 = vpack.c.b16 %v292, %v291
        %v308 = vpack.c.b16 %v294, %v293
        %v309 = vpack.c.b16 %v296, %v295
        %v310 = vpack.c.b16 %v298, %v297
        %v311 = vpack.c.b16 %v300, %v299
        %v312 = vpack.c.b16 %v302, %v301
        %v313 = vpack.c.b16 %v304, %v303
        %v314 = vpack.c.b16 %v306, %v305
        %323 = vmatpush.bf16.msra.mxu0 %v314
        %324 = vmatpush.bf16.msra.mxu0 %v313
        %325 = vmatpush.bf16.msra.mxu0 %v312
        %326 = vmatpush.bf16.msra.mxu0 %v311
        %327 = vmatpush.bf16.msra.mxu0 %v310
        %328 = vmatpush.bf16.msra.mxu0 %v309
        %329 = vmatpush.bf16.msra.mxu0 %v308
        %330 = vmatpush.bf16.msra.mxu0 %v307
        %331 = vmatmul.bf16.gmra.mxu0 %v254
        %v332 = vpop.f32.mrf.mxu0
        %v333 = vadd.f32 %v273, %v332
        %v334 = vpop.f32.mrf.mxu0
        %335 = vdwg.mxu0
        %v336 = vmax.f32 %v333, 0.0
        %v337 = vpack.c.bf16 %v336, %v336
        %v338 = vld [vmem:[#allocation4] sm:$0xf]
        %v339 = vld [vmem:[#allocation4 + $0x4] sm:$0xf]
        %v340 = vld [vmem:[#allocation4 + $0x8] sm:$0xf]
        %v341 = vld [vmem:[#allocation4 + $0xc] sm:$0xf]
        %v342 = vld [vmem:[#allocation4 + $0x10] sm:$0xf]
        %v343 = vld [vmem:[#allocation4 + $0x14] sm:$0xf]
        %v344 = vld [vmem:[#allocation4 + $0x18] sm:$0xf]
        %v345 = vld [vmem:[#allocation4 + $0x1c] sm:$0xf]
        %v346 = vld [vmem:[#allocation4 + $0x20] sm:$0xf]
        %v347 = vld [vmem:[#allocation4 + $0x24] sm:$0xf]
        %v348 = vld [vmem:[#allocation4 + $0x28] sm:$0xf]
        %v349 = vld [vmem:[#allocation4 + $0x2c] sm:$0xf]
        %v350 = vld [vmem:[#allocation4 + $0x30] sm:$0xf]
        %v351 = vld [vmem:[#allocation4 + $0x34] sm:$0xf]
        %v352 = vld [vmem:[#allocation4 + $0x38] sm:$0xf]
        %v353 = vld [vmem:[#allocation4 + $0x3c] sm:$0xf]
        %v354 = vld [vmem:[%s4] sm:$0x1]
        %v356 = vperm.slane %v354, 0
        %v374 = vunpack.c.l.b16 %v338
        %v375 = vunpack.c.l.b16 %v339
        %v376 = vunpack.c.l.b16 %v340
        %v377 = vunpack.c.l.b16 %v341
        %v378 = vunpack.c.l.b16 %v342
        %v379 = vunpack.c.l.b16 %v343
        %v380 = vunpack.c.l.b16 %v344
        %v381 = vunpack.c.l.b16 %v345
        %v382 = vunpack.c.l.b16 %v346
        %v383 = vunpack.c.l.b16 %v347
        %v384 = vunpack.c.l.b16 %v348
        %v385 = vunpack.c.l.b16 %v349
        %v386 = vunpack.c.l.b16 %v350
        %v387 = vunpack.c.l.b16 %v351
        %v388 = vunpack.c.l.b16 %v352
        %v389 = vunpack.c.l.b16 %v353
        %v390 = vpack.c.b16 %v375, %v374
        %v391 = vpack.c.b16 %v377, %v376
        %v392 = vpack.c.b16 %v379, %v378
        %v393 = vpack.c.b16 %v381, %v380
        %v394 = vpack.c.b16 %v383, %v382
        %v395 = vpack.c.b16 %v385, %v384
        %v396 = vpack.c.b16 %v387, %v386
        %v397 = vpack.c.b16 %v389, %v388
        %406 = vmatpush.bf16.msra.mxu0 %v397
        %407 = vmatpush.bf16.msra.mxu0 %v396
        %408 = vmatpush.bf16.msra.mxu0 %v395
        %409 = vmatpush.bf16.msra.mxu0 %v394
        %410 = vmatpush.bf16.msra.mxu0 %v393
        %411 = vmatpush.bf16.msra.mxu0 %v392
        %412 = vmatpush.bf16.msra.mxu0 %v391
        %413 = vmatpush.bf16.msra.mxu0 %v390
        %414 = vmatmul.bf16.gmra.mxu0 %v337
        %v415 = vpop.f32.mrf.mxu0
        %v416 = vadd.f32 %v356, %v415
        %v417 = vpop.f32.mrf.mxu0
        %418 = vdwg.mxu0
        %419 = vst [vmem:[%s253] sm:$0xff] %v416
        %p420 = scmp.lt.s32.totalorder %s18, 1
        %s421 = scalar_select %p420, %s18, 1
        %s422 = smul.addr %s421, 8
        %s423 = scalar_lea.vmem %s5, %s422
        // Predicated region
        $region49: #{_run.1} parent=39 // pred_check
          %p424 = pneg %p146
        $region50: #{_run.1} parent=39 // pred_check_branch
          %426 = sbr.rel (%p424) target = $region52
        $region51: #{_run.1} parent=39 // pred_region
          _
        $region52: #{_run.1} parent=39 // pred_fallthru
          _
      $region40: #{_run.1} parent=5 // pred_fallthru
        _
      %p427 = scmp.le.s32.totalorder 2, %s13
      // Predicated region
      $region53: #{_run.1} parent=5 // pred_check
        %p428 = pneg %p427
      $region54: #{_run.1} parent=5 // pred_check_branch
        %430 = sbr.rel (%p428) target = $region56
      $region55: #{_run.1} parent=5 // pred_region
        %s431 = ssub.s32 %s13, 2
        // Predicated region
        $region57: #{_run.1} parent=55 // pred_check
          %p432 = pneg %p152
        $region58: #{_run.1} parent=55 // pred_check_branch
          %434 = sbr.rel (%p432) target = $region60
        $region59: #{_run.1} parent=55 // pred_region
          %p435 = scmp.lt.s32.totalorder %s19, 1
          %s436 = scalar_select %p435, %s19, 1
          %s437 = smul.addr %s436, 8
          %s438 = scalar_lea.vmem %s5, %s437
        $region60: #{_run.1} parent=55 // pred_fallthru
          _
      $region56: #{_run.1} parent=5 // pred_fallthru
        _
    $region6: #{_run.1} parent=1 // loop_footer
      %s17 = sadd.s32 1, %s13
    $region7: #{_run.1} parent=1 // loop_footer_branch
      %12 = sbr.rel target = $region3
    $region8: #{_run.1} parent=1 // loop_exit
      _
    %439 = vsyncpa [#allocation3], 1
    %s440 = scalar_lea.sflag [#allocation3], 1
    %441 = vsyncpa %s440, 1
    %442 = vsyncpa [#allocation5], 1

</llo_original>
